<compile_context>
chip_gen: v7x
topology: tpu7x:2x2x1
jax: 0.10.0
libtpu: 0.0.40
codegen_flags: <defaults>
</compile_context>

<pallas_src>
import functools

import jax
import jax.numpy as jnp
from jax.experimental import pallas as pl
from jax.experimental.pallas import tpu as pltpu

LANE = 128
# Streaming tile: (2048, 128) f32 = 1 MiB per input per grid step.
# 2 inputs x 2 pipeline buffers (4 MiB) + compiler temporaries stays well
# under v5e's 16 MiB scoped-VMEM default (and v6e/v7x's 32 MiB).
# TODO(synk): on v7x, 4096-8192 rows + vmem_limit_bytes would shave a bit more
# per-step overhead against its 3.2 TB/s HBM.
TILE_ROWS = 2048
# Inputs up to this many (rows, 128) rows (1 MiB / tensor at f32) use the
# grid-less single-tile path.
SINGLE_TILE_MAX_ROWS = 2048
# Leading "parallel" grid axis size: lets both v7x TensorCores participate.
# On single-core chips it is just a 2-iteration sequential outer loop.
NUM_CORES = 2


def _hem_single_kernel(pred_ref, real_ref, loss_ref, *, margin, n_valid):
    """Whole problem in one VMEM tile: no grid, no accumulators, no phases."""
    diff = real_ref[...].astype(jnp.float32) - pred_ref[...].astype(jnp.float32)
    cond = jnp.abs(diff) > margin

    rows, lanes = diff.shape
    if n_valid < rows * lanes:  # static check: only mask if the tail is padded
        idx = (jax.lax.broadcasted_iota(jnp.int32, (rows, lanes), 0) * lanes
               + jax.lax.broadcasted_iota(jnp.int32, (rows, lanes), 1))
        cond = jnp.logical_and(cond, idx < n_valid)

    sumsq = jnp.sum(jnp.where(cond, diff * diff, 0.0))
    cnt = jnp.sum(jnp.where(cond, 1.0, 0.0))
    loss_ref[0, 0] = jnp.where(cnt > 0.0, sumsq / jnp.maximum(cnt, 1.0), 0.0)


def _hem_grid_kernel(pred_ref, real_ref, sq_ref, cnt_ref, *, margin, n_valid,
                     steps_per_core):
    """Streaming path: per-core resident (1,8,128) output accumulators."""
    c = pl.program_id(0)
    i = pl.program_id(1)

    @pl.when(i == 0)
    def _init():
        sq_ref[...] = jnp.zeros_like(sq_ref)
        cnt_ref[...] = jnp.zeros_like(cnt_ref)

    diff = real_ref[...].astype(jnp.float32) - pred_ref[...].astype(jnp.float32)
    cond = jnp.abs(diff) > margin

    rows, lanes = diff.shape
    block_elems = rows * lanes
    block_start = (c * steps_per_core + i) * block_elems

    def _accumulate(keep):
        sq = jnp.where(keep, diff * diff, 0.0)
        cnt = jnp.where(keep, 1.0, 0.0)
        # In-block VALU reduction to a single vreg: (rows,128)->(rows/8,8,128)
        # is layout-preserving and the axis-0 sum is plain vadds (no XLU).
        sq_ref[...] += jnp.sum(sq.reshape(rows // 8, 8, lanes), axis=0)[None]
        cnt_ref[...] += jnp.sum(cnt.reshape(rows // 8, 8, lanes), axis=0)[None]

    is_full = block_start + block_elems <= n_valid

    @pl.when(is_full)
    def _full_block():          # fast path: no index mask at all
        _accumulate(cond)

    @pl.when(jnp.logical_not(is_full))
    def _boundary_block():      # partial / lane-padded / over-the-end block
        local_idx = (
            jax.lax.broadcasted_iota(jnp.int32, (rows, lanes), 0) * lanes
            + jax.lax.broadcasted_iota(jnp.int32, (rows, lanes), 1))
        _accumulate(jnp.logical_and(cond, local_idx < (n_valid - block_start)))


def hem_loss(pred, real, margin):
    """Pallas implementation of HEMLoss.forward. Returns a scalar f32."""
    assert pred.shape == real.shape
    pred_f = jnp.ravel(pred)
    real_f = jnp.ravel(real)
    n = int(pred_f.shape[0])

    # Lane-align the flat length (copies only when n % 128 != 0; padded tail
    # is masked out in-kernel, so correctness holds for any margin).
    # TODO(synk): a manual-DMA path over the flat HBM array would avoid this
    # wrapper-side pad copy for ragged sizes entirely.
    n_lane = pl.cdiv(n, LANE) * LANE
    if n_lane != n:
        pred_f = jnp.pad(pred_f, (0, n_lane - n))
        real_f = jnp.pad(real_f, (0, n_lane - n))
    rows = n_lane // LANE
    pred2 = pred_f.reshape(rows, LANE)
    real2 = real_f.reshape(rows, LANE)

    margin = float(margin)  # static module hyperparameter (as in nn.Module)

    if rows <= SINGLE_TILE_MAX_ROWS:
        # Grid-less path: whole arrays in VMEM, single invocation.
        kernel = functools.partial(_hem_single_kernel, margin=margin, n_valid=n)
        loss = pl.pallas_call(
            kernel,
            out_shape=jax.ShapeDtypeStruct((1, 1), jnp.float32),
            in_specs=[
                pl.BlockSpec(memory_space=pltpu.VMEM),
                pl.BlockSpec(memory_space=pltpu.VMEM),
            ],
            out_specs=pl.BlockSpec(memory_space=pltpu.SMEM),
        )(pred2, real2)
        return loss[0, 0]

    # Streaming path for large feature maps.
    num_blocks = pl.cdiv(rows, TILE_ROWS)
    steps_per_core = pl.cdiv(num_blocks, NUM_CORES)

    def in_index_map(c, i):
        # Clamp so the (at most NUM_CORES-1) grid-padding blocks re-read a
        # valid block; their contribution is masked to zero in-kernel.
        return (jnp.minimum(c * steps_per_core + i, num_blocks - 1), 0)

    kernel = functools.partial(_hem_grid_kernel, margin=margin, n_valid=n,
                               steps_per_core=steps_per_core)
    sq_parts, cnt_parts = pl.pallas_call(
        kernel,
        out_shape=(
            jax.ShapeDtypeStruct((NUM_CORES, 8, LANE), jnp.float32),
            jax.ShapeDtypeStruct((NUM_CORES, 8, LANE), jnp.float32),
        ),
        grid_spec=pltpu.PrefetchScalarGridSpec(
            num_scalar_prefetch=0,
            grid=(NUM_CORES, steps_per_core),
            in_specs=[
                pl.BlockSpec((TILE_ROWS, LANE), in_index_map),
                pl.BlockSpec((TILE_ROWS, LANE), in_index_map),
            ],
            out_specs=(
                pl.BlockSpec((1, 8, LANE), lambda c, i: (c, 0, 0)),
                pl.BlockSpec((1, 8, LANE), lambda c, i: (c, 0, 0)),
            ),
        ),
        compiler_params=pltpu.CompilerParams(
            dimension_semantics=("parallel", "arbitrary")),
    )(pred2, real2)

    # Tiny final combine (2 x NUM_CORES x 8 x 128 partials) + divide.
    sumsq = jnp.sum(sq_parts)
    cnt = jnp.sum(cnt_parts)
    return jnp.where(cnt > 0.0, sumsq / jnp.maximum(cnt, 1.0), 0.0)


def hem_loss_ref(pred, real, margin):
    """Pure-JAX reference of the PyTorch forward."""
    diff = (real - pred).astype(jnp.float32)
    mask = jnp.abs(diff) > margin
    cnt = jnp.sum(mask.astype(jnp.float32))
    sumsq = jnp.sum(jnp.where(mask, diff * diff, 0.0))
    return jnp.where(cnt > 0, sumsq / jnp.maximum(cnt, 1.0), 0.0)


if __name__ == "__main__":
    key = jax.random.PRNGKey(0)
    k1, k2 = jax.random.split(key)
    margin = 0.5  # HEMLoss(margin) init parameter, deterministic in-script

    # Small NCHW-shaped prediction / target tensors (single-tile path).
    shape = (2, 4, 16, 16)
    pred = jax.random.normal(k1, shape, dtype=jnp.float32)
    real = jax.random.normal(k2, shape, dtype=jnp.float32)
    out = jax.block_until_ready(hem_loss(pred, real, margin))
    expected = hem_loss_ref(pred, real, margin)
    assert jnp.allclose(out, expected, rtol=1e-5, atol=1e-6), (out, expected)

    # "No hard examples" branch (loss must be exactly 0).
    out_zero = jax.block_until_ready(hem_loss(pred, pred, margin))
    assert float(out_zero) == 0.0, out_zero

    # Ragged (non-multiple-of-128) size -> single-tile path with tail masking.
    shape_r = (3, 5, 7, 11)
    pred_r = jax.random.normal(k1, shape_r, dtype=jnp.float32)
    real_r = jax.random.normal(k2, shape_r, dtype=jnp.float32)
    out_r = jax.block_until_ready(hem_loss(pred_r, real_r, margin))
    exp_r = hem_loss_ref(pred_r, real_r, margin)
    assert jnp.allclose(out_r, exp_r, rtol=1e-5, atol=1e-6), (out_r, exp_r)

    # Streaming (multi-tile, dual-core-split) path: full blocks only.
    big_shape = (2, 4, 256, 256)
    pred_b = jax.random.normal(k1, big_shape, dtype=jnp.float32)
    real_b = jax.random.normal(k2, big_shape, dtype=jnp.float32)
    out_b = jax.block_until_ready(hem_loss(pred_b, real_b, margin))
    exp_b = hem_loss_ref(pred_b, real_b, margin)
    assert jnp.allclose(out_b, exp_b, rtol=1e-4, atol=1e-6), (out_b, exp_b)

    # Streaming path with a partial boundary block AND a clamped grid-padding
    # block (odd number of blocks across the two cores).
    odd_shape = (1, 1, 700, 1000)
    pred_o = jax.random.normal(k1, odd_shape, dtype=jnp.float32)
    real_o = jax.random.normal(k2, odd_shape, dtype=jnp.float32)
    out_o = jax.block_until_ready(hem_loss(pred_o, real_o, margin))
    exp_o = hem_loss_ref(pred_o, real_o, margin)
    assert jnp.allclose(out_o, exp_o, rtol=1e-4, atol=1e-6), (out_o, exp_o)

    print("KERNEL_OK")
</pallas_src>

<mosaic_0001>
module attributes {stable_mosaic.version = 11 : i64} {
  func.func @_hem_single_kernel(%arg0: memref<16x128xf32, #tpu.memory_space<vmem>>, %arg1: memref<16x128xf32, #tpu.memory_space<vmem>>, %arg2: memref<1x1xf32, #tpu.memory_space<smem>>) attributes {dimension_semantics = [], scalar_prefetch = 0 : i64, scratch_operands = 0 : i64, tpu.core_type = #tpu.core_type<tc>} {
    %c0 = arith.constant 0 : index
    %c0_0 = arith.constant 0 : index
    %0 = vector.load %arg1[%c0, %c0_0] : memref<16x128xf32, #tpu.memory_space<vmem>>, vector<16x128xf32>
    %c0_1 = arith.constant 0 : index
    %c0_2 = arith.constant 0 : index
    %1 = vector.load %arg0[%c0_1, %c0_2] : memref<16x128xf32, #tpu.memory_space<vmem>>, vector<16x128xf32>
    %2 = arith.subf %0, %1 : vector<16x128xf32>
    %3 = math.absf %2 : vector<16x128xf32>
    %cst = arith.constant 5.000000e-01 : f32
    %4 = vector.broadcast %cst : f32 to vector<16x128xf32>
    %5 = arith.cmpf ogt, %3, %4 : vector<16x128xf32>
    %6 = arith.mulf %2, %2 : vector<16x128xf32>
    %cst_3 = arith.constant 0.000000e+00 : f32
    %7 = vector.broadcast %cst_3 : f32 to vector<16x128xf32>
    %8 = arith.select %5, %6, %7 : vector<16x128xi1>, vector<16x128xf32>
    %9 = vector.shape_cast %8 : vector<16x128xf32> to vector<1x16x128xf32>
    %cst_4 = arith.constant dense<0.000000e+00> : vector<1xf32>
    %10 = vector.multi_reduction <add>, %9, %cst_4 [1, 2] : vector<1x16x128xf32> to vector<1xf32>
    %11 = vector.shape_cast %10 : vector<1xf32> to vector<1x1x1xf32>
    %12 = vector.extract %11[0, 0, 0] : f32 from vector<1x1x1xf32>
    %cst_5 = arith.constant 1.000000e+00 : f32
    %cst_6 = arith.constant 0.000000e+00 : f32
    %13 = vector.broadcast %cst_5 : f32 to vector<16x128xf32>
    %14 = vector.broadcast %cst_6 : f32 to vector<16x128xf32>
    %15 = arith.select %5, %13, %14 : vector<16x128xi1>, vector<16x128xf32>
    %16 = vector.shape_cast %15 : vector<16x128xf32> to vector<1x16x128xf32>
    %cst_7 = arith.constant dense<0.000000e+00> : vector<1xf32>
    %17 = vector.multi_reduction <add>, %16, %cst_7 [1, 2] : vector<1x16x128xf32> to vector<1xf32>
    %18 = vector.shape_cast %17 : vector<1xf32> to vector<1x1x1xf32>
    %19 = vector.extract %18[0, 0, 0] : f32 from vector<1x1x1xf32>
    %cst_8 = arith.constant 0.000000e+00 : f32
    %20 = arith.cmpf ogt, %19, %cst_8 : f32
    %cst_9 = arith.constant 1.000000e+00 : f32
    %21 = arith.maximumf %19, %cst_9 : f32
    %22 = arith.divf %12, %21 : f32
    %cst_10 = arith.constant 0.000000e+00 : f32
    %23 = arith.select %20, %22, %cst_10 : f32
    %c0_11 = arith.constant 0 : index
    %c0_12 = arith.constant 0 : index
    %24 = memref.load %arg2[%c0_11, %c0_12] : memref<1x1xf32, #tpu.memory_space<smem>>
    memref.store %23, %arg2[%c0_11, %c0_12] : memref<1x1xf32, #tpu.memory_space<smem>>
    return
  }
}

</mosaic_0001>

<llo_original>
// kernel: tpu_custom_call.1
$region0: #{tpu_custom_call.1}
  #allocation0 [shape = 'u32[]', space=smem, size = 0x4, offset = 0x4, fixed_abs, tag = 'smem constant byte address 0x4 - core index']
  #allocation1 [shape = 'u32[144,128]{1,0:T(1,128)}', space=vmem, size = 0x12000, scoped, tag = 'internal scratch']
  %s0 = inlined_call_operand.hbm [shape: f32[16,128], index: 0, kind: input, shape index: {}]
  %s1 = inlined_call_operand.hbm [shape: f32[16,128], index: 1, kind: input, shape index: {}]
  %s2 = inlined_call_operand.hbm [shape: f32[1,1], index: 2, kind: output, shape index: {}]
  %s3 = sld [smem:[#allocation0]]
  $region26: #{tpu_custom_call.1} parent=0
    _
  %s5 = ssub.s32 1, %s3
  %s6 = scalar_select 0, %s5, %s3
  $region1: #{tpu_custom_call.1} parent=0
    #allocation2 [shape = 'u8[8192]{0}', space=vmem, size = 0x2000, scoped, tag = 'input window, operand 0, single buffered']
    #allocation3 [shape = 's32[1]{0}', space=sflag, size = 0x4, scoped, tag = 'scoped memory for tpu_custom_call.1']
    #allocation4 [shape = 's32[1]{0}', space=sflag, size = 0x4, scoped, tag = 'scoped memory for tpu_custom_call.1']
    #allocation5 [shape = 'u8[8192]{0}', space=vmem, size = 0x2000, scoped, tag = 'input window, operand 1, single buffered']
    #allocation6 [shape = 's32[1]{0}', space=sflag, size = 0x4, scoped, tag = 'scoped memory for tpu_custom_call.1']
    #allocation7 [shape = 'u8[512]{0}', space=smem, size = 0x200, scoped, tag = 'output window, operand 0, single buffered']
    %7 = vsyncpa [#allocation3], 0
    %8 = vsyncpa [#allocation6], 0
    %9 = vsyncpa [#allocation4], 0
    // Predicated region
    $region2: #{tpu_custom_call.1} parent=1 // pred_check
      _
    $region3: #{tpu_custom_call.1} parent=1 // pred_check_branch
      %11 = sbr.rel (0) target = $region5
    $region4: #{tpu_custom_call.1} parent=1 // pred_region
      %s13 = ssub.s32 256, 256
      %14 = vsyncadd [#allocation3], %s13
      %s15 = sshll.u32 [#allocation2], 4
      %s16 = int_to_ptr.vmem [resolvable:$true] %s15
      %21 = dma.hbm_to_vmem [thread:$0]  %s0, 256, %s16, [#allocation3], 128, 128, 8
    $region5: #{tpu_custom_call.1} parent=1 // pred_fallthru
      _
    // Predicated region
    $region6: #{tpu_custom_call.1} parent=1 // pred_check
      _
    $region7: #{tpu_custom_call.1} parent=1 // pred_check_branch
      %23 = sbr.rel (0) target = $region9
    $region8: #{tpu_custom_call.1} parent=1 // pred_region
      %s25 = ssub.s32 256, 256
      %26 = vsyncadd [#allocation6], %s25
      %s27 = sshll.u32 [#allocation5], 4
      %s28 = int_to_ptr.vmem [resolvable:$true] %s27
      %33 = dma.hbm_to_vmem [thread:$0]  %s1, 256, %s28, [#allocation6], 128, 128, 8
    $region9: #{tpu_custom_call.1} parent=1 // pred_fallthru
      _
    // Predicated region
    $region10: #{tpu_custom_call.1} parent=1 // pred_check
      _
    $region11: #{tpu_custom_call.1} parent=1 // pred_check_branch
      %35 = sbr.rel (0) target = $region13
    $region12: #{tpu_custom_call.1} parent=1 // pred_region
      %36 = dma.done [#allocation3], 256
    $region13: #{tpu_custom_call.1} parent=1 // pred_fallthru
      _
    // Predicated region
    $region14: #{tpu_custom_call.1} parent=1 // pred_check
      _
    $region15: #{tpu_custom_call.1} parent=1 // pred_check_branch
      %38 = sbr.rel (0) target = $region17
    $region16: #{tpu_custom_call.1} parent=1 // pred_region
      %39 = dma.done [#allocation6], 256
    $region17: #{tpu_custom_call.1} parent=1 // pred_fallthru
      _
    %v40 = vld [vmem:[#allocation5] sm:$0xff]
    %v41 = vld [vmem:[#allocation5 + $0x8] sm:$0xff]
    %v42 = vld [vmem:[#allocation2] sm:$0xff]
    %v43 = vld [vmem:[#allocation2 + $0x8] sm:$0xff]
    %v44 = vsub.f32 %v40, %v42
    %v45 = vsub.f32 %v41, %v43
    %v46 = vand.u32 2147483647, %v44
    %v47 = vand.u32 2147483647, %v45
    %vm48 = vcmp.gt.f32.partialorder %v46, 0.5
    %vm49 = vcmp.gt.f32.partialorder %v47, 0.5
    %v50 = vmul.f32 %v44, %v44
    %v51 = vmul.f32 %v45, %v45
    %v52 = vsel %vm48, %v50, 0.0
    %v53 = vsel %vm49, %v51, 0.0
    %v54 = vadd.f32 %v52, %v53
    %55 = vadd.xlane.f32.xlu0 %v54
    %v56 = vpop.xlane.xlu0 %55
    %v57 = vrot.slane %v56, 4
    %v58 = vadd.f32 %v56, %v57
    %v59 = vrot.slane %v58, 2
    %v60 = vadd.f32 %v58, %v59
    %v61 = vrot.slane %v60, 1
    %v62 = vadd.f32 %v60, %v61
    %s63 = vtos %v62
    %v64 = vsel %vm48, 1.0, 0.0
    %v65 = vsel %vm49, 1.0, 0.0
    %v66 = vadd.f32 %v64, %v65
    %67 = vadd.xlane.f32.xlu0 %v66
    %v68 = vpop.xlane.xlu0 %67
    %v69 = vrot.slane %v68, 4
    %v70 = vadd.f32 %v68, %v69
    %v71 = vrot.slane %v70, 2
    %v72 = vadd.f32 %v70, %v71
    %v73 = vrot.slane %v72, 1
    %v74 = vadd.f32 %v72, %v73
    %s75 = vtos %v74
    %p76 = scmp.gt.f32.partialorder %s75, 0.0
    %s77 = smax.f32 %s75, 1.0
    %v78 = vstv %s77
    %v79 = vrcp.pop %v78
    %s80 = vtos %v79
    %s81 = smul.f32 %s63, %s80
    %s82 = scalar_select %p76, %s81, 0.0
    %s83 = scalar_lea.smem [#allocation7], 0
    %84 = sst [smem:[%s83]] %s82
    // Predicated region
    $region18: #{tpu_custom_call.1} parent=1 // pred_check
      _
    $region19: #{tpu_custom_call.1} parent=1 // pred_check_branch
      %86 = sbr.rel (0) target = $region21
    $region20: #{tpu_custom_call.1} parent=1 // pred_region
      %s88 = ssub.s32 16, 16
      %89 = vsyncadd [#allocation4], %s88
      %92 = dma.smem_to_hbm [#allocation7], 16, %s2, [#allocation4]
    $region21: #{tpu_custom_call.1} parent=1 // pred_fallthru
      _
    // Predicated region
    $region22: #{tpu_custom_call.1} parent=1 // pred_check
      _
    $region23: #{tpu_custom_call.1} parent=1 // pred_check_branch
      %94 = sbr.rel (0) target = $region25
    $region24: #{tpu_custom_call.1} parent=1 // pred_region
      %95 = dma.done [#allocation4], 16
    $region25: #{tpu_custom_call.1} parent=1 // pred_fallthru
      _
    %96 = sfence
    %97 = vsyncpa [#allocation3], 1
    %98 = vsyncpa [#allocation6], 1
    %99 = vsyncpa [#allocation4], 1

</llo_original>
